<compile_context>
chip_gen: v6e
topology: v6e:2x2x1
jax: 0.10.0
libtpu: 0.0.40
codegen_flags: <defaults>
</compile_context>

<pallas_src>
import functools

import jax
import jax.numpy as jnp
from jax.experimental import pallas as pl
from jax.experimental.pallas import tpu as pltpu


def _adain_kernel(x_ref, gb_ref, o_ref, *, hw: int):
    # x: (TILE_R, HW); gb: (TILE_R, 2) f32 = [gamma, beta] per row.
    inv_hw = 1.0 / hw
    xf = x_ref[...].astype(jnp.float32)
    s1 = jnp.sum(xf, axis=-1, keepdims=True)
    s2 = jnp.sum(xf * xf, axis=-1, keepdims=True)
    mean = s1 * inv_hw
    var = jnp.maximum(s2 * inv_hw - mean * mean, 0.0)   # clamp: cancellation
    inv_std = jax.lax.rsqrt(var + 1e-5)
    gamma = gb_ref[:, 0:1]
    beta = gb_ref[:, 1:2]
    scale = (1.0 + gamma) * inv_std                     # (TILE_R, 1)
    shift = beta - scale * mean                         # (TILE_R, 1)
    # Re-read / re-cast x so the f32 temp of a bf16/int8 tile is not kept
    # live across stats and affine (keeps vreg/VMEM pressure at ~1x tile).
    o_ref[...] = (scale * x_ref[...].astype(jnp.float32) + shift).astype(o_ref.dtype)


def prepare_fc_params(fc_w, fc_b):
    """Init-time (hoisted) prep of nn.Linear(style_dim, 2C) params.

    fc_w: (2C, style_dim) PyTorch layout, fc_b: (2C,).
    Returns a (style_dim, 2C) f32 weight and (2C,) f32 bias whose columns are
    permuted so that (s @ w + b).reshape(N*C, 2) is [gamma_c, beta_c] per row
    (no per-call transpose / strided gamma-beta slicing in the forward).
    """
    two_c = fc_w.shape[0]
    c = two_c // 2
    perm = jnp.stack([jnp.arange(c), jnp.arange(c) + c], axis=1).reshape(-1)
    w_t = jnp.asarray(fc_w, jnp.float32).T[:, perm]
    b = jnp.asarray(fc_b, jnp.float32)[perm]
    return w_t, b


def adain_forward(x, s, fc_wt_gb, fc_b_gb, *, block_rows=None):
    """AdaIN forward.

    x:        (N, C, H, W)
    s:        (N, style_dim)
    fc_wt_gb: (style_dim, 2*C) f32, from prepare_fc_params
    fc_b_gb:  (2*C,) f32, from prepare_fc_params
    """
    N, C, H, W = x.shape
    rows, hw = N * C, H * W

    # ---- fc (tiny, leave to XLA): interleaved gamma/beta -> (rows, 2) f32 ----
    gb = (s.astype(jnp.float32) @ fc_wt_gb + fc_b_gb).reshape(rows, 2)

    # ---- flatten; spatial axis stays at full extent (no pad / no slice) ----
    x_flat = x.reshape(rows, hw)

    # ---- row tiling ----
    bytes_per_el = x_flat.dtype.itemsize
    sub = max(8, 32 // bytes_per_el)          # sublane pack: 8 f32 / 16 bf16 / 32 i8
    if block_rows is not None:
        tile_r = block_rows
    else:
        target_bytes = 4 * 1024 * 1024        # ~4 MiB x blocks
        by_bytes = (target_bytes // max(1, hw * bytes_per_el)) // sub * sub
        half = -(-rows // 2)                  # ceil(rows/2): >= 2 grid steps
        half = -(-half // sub) * sub          # (v7x megacore uses both TCs)
        tile_r = max(sub, min(by_bytes, half))
        if tile_r < rows and rows % tile_r != 0:
            # prefer an even split (no wasted partial last block) if it costs
            # at most ~2x in tile size
            cand = tile_r
            while cand >= max(sub, tile_r // 2):
                if rows % cand == 0:
                    tile_r = cand
                    break
                cand -= sub
    if tile_r >= rows:
        tile_r = rows                         # full extent -> always legal

    grid = (pl.cdiv(rows, tile_r),)

    # ---- VMEM budget: 2x in + 2x out double-buffered blocks (+ margin) ----
    hw_lanes = -(-hw // 128) * 128
    rows_pad = -(-tile_r // sub) * sub
    tile_vmem = rows_pad * hw_lanes * bytes_per_el
    vmem_limit = min(max(4 * tile_vmem + (2 << 20), 32 << 20), 128 << 20)
    # TODO(synk): if even a tile_r=8 full-width block overflows VMEM (H*W
    # beyond ~2M f32 elements on v7x's 64 MiB), add a second "arbitrary" grid
    # axis over spatial chunks with f32 scratch accumulators (s1, s2 per row)
    # and a second normalize pass instead of one giant block.

    out = pl.pallas_call(
        functools.partial(_adain_kernel, hw=hw),
        out_shape=jax.ShapeDtypeStruct((rows, hw), x.dtype),
        grid=grid,
        in_specs=[
            pl.BlockSpec((tile_r, hw), lambda i: (i, 0)),
            pl.BlockSpec((tile_r, 2), lambda i: (i, 0)),
        ],
        out_specs=pl.BlockSpec((tile_r, hw), lambda i: (i, 0)),
        compiler_params=pltpu.CompilerParams(
            dimension_semantics=("parallel",),
            vmem_limit_bytes=int(vmem_limit)),
    )(x_flat, gb)

    return out.reshape(N, C, H, W)


def _reference(x, s, fc_w, fc_b):
    # pure-JAX reference of the PyTorch forward
    N, C, H, W = x.shape
    h = s @ fc_w.T + fc_b
    gamma = h[:, :C].reshape(N, C, 1, 1)
    beta = h[:, C:].reshape(N, C, 1, 1)
    mean = jnp.mean(x, axis=(2, 3), keepdims=True)
    var = jnp.mean((x - mean) ** 2, axis=(2, 3), keepdims=True)
    xn = (x - mean) * jax.lax.rsqrt(var + 1e-5)
    return (1.0 + gamma) * xn + beta


if __name__ == "__main__":
    key = jax.random.PRNGKey(0)
    kx, ks, kw, kb, kx2, ks2, kw2, kb2 = jax.random.split(key, 8)

    # ---- main test: N=2, C=4, 16x16 spatial, style_dim=8 ----
    N, C, H, W, style_dim = 2, 4, 16, 16, 8
    x = jax.random.normal(kx, (N, C, H, W), dtype=jnp.float32)
    s = jax.random.normal(ks, (N, style_dim), dtype=jnp.float32)
    fc_w = 0.1 * jax.random.normal(kw, (2 * C, style_dim), dtype=jnp.float32)
    fc_b = 0.1 * jax.random.normal(kb, (2 * C,), dtype=jnp.float32)
    fc_wt_gb, fc_b_gb = prepare_fc_params(fc_w, fc_b)     # init-time hoist

    out = jax.block_until_ready(adain_forward(x, s, fc_wt_gb, fc_b_gb))
    ref = _reference(x, s, fc_w, fc_b)
    assert out.shape == (N, C, H, W)
    assert jnp.allclose(out, ref, atol=1e-4, rtol=1e-4)

    # ---- robustness test: hw % 128 != 0 and rows % tile_r != 0 ----
    N2, C2, H2, W2 = 3, 5, 9, 9
    x2 = jax.random.normal(kx2, (N2, C2, H2, W2), dtype=jnp.float32)
    s2 = jax.random.normal(ks2, (N2, style_dim), dtype=jnp.float32)
    fc_w2 = 0.1 * jax.random.normal(kw2, (2 * C2, style_dim), dtype=jnp.float32)
    fc_b2 = 0.1 * jax.random.normal(kb2, (2 * C2,), dtype=jnp.float32)
    fc_wt2, fc_b2p = prepare_fc_params(fc_w2, fc_b2)
    out2 = jax.block_until_ready(
        adain_forward(x2, s2, fc_wt2, fc_b2p, block_rows=8))
    ref2 = _reference(x2, s2, fc_w2, fc_b2)
    assert out2.shape == (N2, C2, H2, W2)
    assert jnp.allclose(out2, ref2, atol=1e-4, rtol=1e-4)

    print("KERNEL_OK")
</pallas_src>

<mosaic_0001>
module attributes {stable_mosaic.version = 11 : i64} {
  func.func @_adain_kernel(%arg0: i32, %arg1: memref<8x256xf32, #tpu.memory_space<vmem>>, %arg2: memref<8x2xf32, #tpu.memory_space<vmem>>, %arg3: memref<8x256xf32, #tpu.memory_space<vmem>>) attributes {dimension_semantics = [#tpu.dimension_semantics<parallel>], iteration_bounds = array<i64: 1>, scalar_prefetch = 0 : i64, scratch_operands = 0 : i64, tpu.core_type = #tpu.core_type<tc>, window_params = [{transform_indices = @transform_0, window_bounds = array<i64: 8, 256>}, {transform_indices = @transform_1, window_bounds = array<i64: 8, 2>}, {transform_indices = @transform_2, window_bounds = array<i64: 8, 256>}]} {
    %c0 = arith.constant 0 : index
    %c0_0 = arith.constant 0 : index
    %0 = vector.load %arg1[%c0, %c0_0] : memref<8x256xf32, #tpu.memory_space<vmem>>, vector<8x256xf32>
    %cst = arith.constant dense<0.000000e+00> : vector<8xf32>
    %1 = vector.multi_reduction <add>, %0, %cst [1] : vector<8x256xf32> to vector<8xf32>
    %2 = vector.shape_cast %1 : vector<8xf32> to vector<8x1xf32>
    %3 = arith.mulf %0, %0 : vector<8x256xf32>
    %cst_1 = arith.constant dense<0.000000e+00> : vector<8xf32>
    %4 = vector.multi_reduction <add>, %3, %cst_1 [1] : vector<8x256xf32> to vector<8xf32>
    %5 = vector.shape_cast %4 : vector<8xf32> to vector<8x1xf32>
    %cst_2 = arith.constant 3.906250e-03 : f32
    %6 = vector.broadcast %cst_2 : f32 to vector<8x1xf32>
    %7 = arith.mulf %2, %6 : vector<8x1xf32>
    %cst_3 = arith.constant 3.906250e-03 : f32
    %8 = vector.broadcast %cst_3 : f32 to vector<8x1xf32>
    %9 = arith.mulf %5, %8 : vector<8x1xf32>
    %10 = arith.mulf %7, %7 : vector<8x1xf32>
    %11 = arith.subf %9, %10 : vector<8x1xf32>
    %cst_4 = arith.constant 0.000000e+00 : f32
    %12 = vector.broadcast %cst_4 : f32 to vector<8x1xf32>
    %13 = arith.maximumf %11, %12 : vector<8x1xf32>
    %cst_5 = arith.constant 9.99999974E-6 : f32
    %14 = vector.broadcast %cst_5 : f32 to vector<8x1xf32>
    %15 = arith.addf %13, %14 : vector<8x1xf32>
    %16 = math.rsqrt %15 : vector<8x1xf32>
    %c0_6 = arith.constant 0 : index
    %c0_7 = arith.constant 0 : index
    %17 = vector.load %arg2[%c0_6, %c0_7] : memref<8x2xf32, #tpu.memory_space<vmem>>, vector<8x1xf32>
    %c0_8 = arith.constant 0 : index
    %c1 = arith.constant 1 : index
    %18 = vector.load %arg2[%c0_8, %c1] : memref<8x2xf32, #tpu.memory_space<vmem>>, vector<8x1xf32>
    %cst_9 = arith.constant 1.000000e+00 : f32
    %19 = vector.broadcast %cst_9 : f32 to vector<8x1xf32>
    %20 = arith.addf %19, %17 : vector<8x1xf32>
    %21 = arith.mulf %20, %16 : vector<8x1xf32>
    %22 = arith.mulf %21, %7 : vector<8x1xf32>
    %23 = arith.subf %18, %22 : vector<8x1xf32>
    %c0_10 = arith.constant 0 : index
    %c0_11 = arith.constant 0 : index
    %24 = vector.load %arg1[%c0_10, %c0_11] : memref<8x256xf32, #tpu.memory_space<vmem>>, vector<8x256xf32>
    %25 = vector.broadcast %21 : vector<8x1xf32> to vector<8x256xf32>
    %26 = arith.mulf %25, %24 : vector<8x256xf32>
    %27 = vector.broadcast %23 : vector<8x1xf32> to vector<8x256xf32>
    %28 = arith.addf %26, %27 : vector<8x256xf32>
    %c0_12 = arith.constant 0 : index
    %c0_13 = arith.constant 0 : index
    %29 = vector.load %arg3[%c0_12, %c0_13] : memref<8x256xf32, #tpu.memory_space<vmem>>, vector<8x256xf32>
    tpu.vector_store %arg3[%c0_12, %c0_13], %28 {strides = array<i32>} : memref<8x256xf32, #tpu.memory_space<vmem>>, vector<8x256xf32>,
    return
  }
  func.func @transform_0(%arg0: i32) -> (i32, i32) {
    %c0_i32 = arith.constant 0 : i32
    %c0_i32_0 = arith.constant 0 : i32
    return %arg0, %c0_i32 : i32, i32
  }
  func.func @transform_1(%arg0: i32) -> (i32, i32) {
    %c0_i32 = arith.constant 0 : i32
    %c0_i32_0 = arith.constant 0 : i32
    return %arg0, %c0_i32 : i32, i32
  }
  func.func @transform_2(%arg0: i32) -> (i32, i32) {
    %c0_i32 = arith.constant 0 : i32
    %c0_i32_0 = arith.constant 0 : i32
    return %arg0, %c0_i32 : i32, i32
  }
}

</mosaic_0001>

<llo_original>
// kernel: tpu_custom_call.1
$region0: #{tpu_custom_call.1}
  #allocation0 [shape = 'u32[]', space=smem, size = 0x4, offset = 0x4, fixed_abs, tag = 'smem constant byte address 0x4 - core index']
  #allocation1 [shape = 'u32[144,128]{1,0:T(1,128)}', space=vmem, size = 0x12000, scoped, tag = 'internal scratch']
  %s0 = inlined_call_operand.hbm [shape: f32[8,256], index: 0, kind: input, shape index: {}]
  %s1 = inlined_call_operand.vmem [shape: f32[8,2], index: 1, kind: input, shape index: {}]
  %s2 = inlined_call_operand.hbm [shape: f32[8,256], index: 2, kind: output, shape index: {}]
  %s3 = sld [smem:[#allocation0]]
  $region22: #{tpu_custom_call.1} parent=0
    _
  %s5 = ssub.s32 1, %s3
  %s6 = scalar_select 0, %s5, %s3
  $region1: #{tpu_custom_call.1} parent=0
    #allocation2 [shape = 'u8[8192]{0}', space=vmem, size = 0x2000, scoped, tag = 'input window, operand 0, single buffered']
    #allocation3 [shape = 's32[1]{0}', space=sflag, size = 0x4, scoped, tag = 'scoped memory for tpu_custom_call.1']
    #allocation4 [shape = 's32[1]{0}', space=sflag, size = 0x4, scoped, tag = 'scoped memory for tpu_custom_call.1']
    #allocation5 [shape = 'u8[8192]{0}', space=vmem, size = 0x2000, scoped, tag = 'output window, operand 0, single buffered']
    %7 = vsyncpa [#allocation3], 0
    %8 = vsyncpa [#allocation4], 0
    // Predicated region
    $region2: #{tpu_custom_call.1} parent=1 // pred_check
      _
    $region3: #{tpu_custom_call.1} parent=1 // pred_check_branch
      %10 = sbr.rel (0) target = $region5
    $region4: #{tpu_custom_call.1} parent=1 // pred_region
      %s12 = ssub.s32 256, 256
      %13 = vsyncadd [#allocation3], %s12
      %s15 = sshll.u32 [#allocation2], 4
      %s16 = int_to_ptr.vmem [resolvable:$true] %s15
      %18 = dma.hbm_to_vmem [thread:$0]  %s0, 256, %s16, [#allocation3]
    $region5: #{tpu_custom_call.1} parent=1 // pred_fallthru
      _
    // Predicated region
    $region6: #{tpu_custom_call.1} parent=1 // pred_check
      _
    $region7: #{tpu_custom_call.1} parent=1 // pred_check_branch
      %20 = sbr.rel (0) target = $region9
    $region8: #{tpu_custom_call.1} parent=1 // pred_region
      _
    $region9: #{tpu_custom_call.1} parent=1 // pred_fallthru
      _
    // Predicated region
    $region10: #{tpu_custom_call.1} parent=1 // pred_check
      _
    $region11: #{tpu_custom_call.1} parent=1 // pred_check_branch
      %22 = sbr.rel (0) target = $region13
    $region12: #{tpu_custom_call.1} parent=1 // pred_region
      %23 = dma.done [#allocation3], 256
    $region13: #{tpu_custom_call.1} parent=1 // pred_fallthru
      _
    %v24 = vld [vmem:[#allocation2] sm:$0xff]
    %v25 = vld [vmem:[#allocation2 + $0x8] sm:$0xff]
    %v26 = vadd.f32 %v24, %v25
    %27 = vadd.xlane.f32.xlu0 %v26
    %v28 = vpop.xlane.xlu0 %27
    %v29 = vmul.f32 %v24, %v24
    %v30 = vmul.f32 %v25, %v25
    %v31 = vadd.f32 %v29, %v30
    %32 = vadd.xlane.f32.xlu0 %v31
    %v33 = vpop.xlane.xlu0 %32
    %v34 = vmul.f32 %v28, 0.00390625
    %v35 = vmul.f32 %v33, 0.00390625
    %v36 = vmul.f32 %v34, %v34
    %v37 = vsub.f32 %v35, %v36
    %v38 = vmax.f32 %v37, 0.0
    %v39 = vadd.f32 %v38, 1e-05
    %v40 = vrsqrt.pop %v39
    %v41 = vld [vmem:[%s1] sm:$0xff]
    %v42 = vadd.f32 %v41, 1.0
    %v43 = vmul.f32 %v42, %v40
    %v44 = vmul.f32 %v43, %v34
    %46 = vrot.lane.b32.xlu0 %v44, 1
    %v47 = vpop.permute.xlu0 %46
    %v49 = vsub.f32 %v41, %v47
    %51 = vset.pattern.permute.xlu0 0
    %52 = vperm.xlu0 %51, %v43
    %v53 = vpop.permute.xlu0 %52
    %v55 = vmul.f32 %v53, %v24
    %v56 = vmul.f32 %v53, %v25
    %58 = vset.pattern.permute.xlu0 1
    %59 = vperm.xlu0 %58, %v49
    %v60 = vpop.permute.xlu0 %59
    %v62 = vadd.f32 %v55, %v60
    %v63 = vadd.f32 %v56, %v60
    %64 = vst [vmem:[#allocation5] sm:$0xff] %v62
    %65 = vst [vmem:[#allocation5 + $0x8] sm:$0xff] %v63
    // Predicated region
    $region14: #{tpu_custom_call.1} parent=1 // pred_check
      _
    $region15: #{tpu_custom_call.1} parent=1 // pred_check_branch
      %67 = sbr.rel (0) target = $region17
    $region16: #{tpu_custom_call.1} parent=1 // pred_region
      %s69 = ssub.s32 256, 256
      %70 = vsyncadd [#allocation4], %s69
      %s72 = sshll.u32 [#allocation5], 4
      %s73 = int_to_ptr.vmem [resolvable:$true] %s72
      %75 = dma.vmem_to_hbm [thread:$0]  %s73, 256, %s2, [#allocation4]
    $region17: #{tpu_custom_call.1} parent=1 // pred_fallthru
      _
    // Predicated region
    $region18: #{tpu_custom_call.1} parent=1 // pred_check
      _
    $region19: #{tpu_custom_call.1} parent=1 // pred_check_branch
      %77 = sbr.rel (0) target = $region21
    $region20: #{tpu_custom_call.1} parent=1 // pred_region
      %78 = dma.done [#allocation4], 256
    $region21: #{tpu_custom_call.1} parent=1 // pred_fallthru
      _
    %79 = vsyncpa [#allocation3], 1
    %80 = vsyncpa [#allocation4], 1

</llo_original>
